<compile_context>
chip_gen: v7x
topology: tpu7x:2x2x1
jax: 0.10.0
libtpu: 0.0.40
codegen_flags: <defaults>
</compile_context>

<pallas_src>
import functools

import jax
import jax.numpy as jnp
from jax import lax
from jax.experimental import pallas as pl
from jax.experimental.pallas import tpu as pltpu


_SUPPORTED_ACTS = (
    "", "relu", "relu6", "sigmoid", "tanh", "gelu", "silu", "swish", "softplus", "elu",
)

_LANE = 128
_MAX_SINGLE_TK = 2048            # collapse the K grid axis when k_pad fits one block
_VMEM_SOFT_BUDGET = 24 * 2**20   # per-call working-set target (fits every TPU gen)


def _round_up(n, m):
    return (n + m - 1) // m * m


def _sublane_min(dtype):
    # Minimum second-to-last tile dim: 8 for 4-byte, 16 for 2-byte, 32 for 1-byte.
    return {4: 8, 2: 16, 1: 32}.get(jnp.dtype(dtype).itemsize, 8)


def _pick_tile(dim, candidates):
    for c in candidates:
        if c <= dim and dim % c == 0:
            return c
    return dim


def _apply_activation(x, act_func):
    if act_func == "":
        return x
    if act_func == "relu":
        return jnp.maximum(x, 0.0)
    if act_func == "relu6":
        return jnp.clip(x, 0.0, 6.0)
    if act_func == "sigmoid":
        return jax.nn.sigmoid(x)
    if act_func == "tanh":
        return jnp.tanh(x)
    if act_func == "gelu":
        # tanh-approx GELU stays on the EUP (free slot alongside MXU/vst work).
        return jax.nn.gelu(x, approximate=True)
    if act_func in ("silu", "swish"):
        return x * jax.nn.sigmoid(x)
    if act_func == "softplus":
        return jax.nn.softplus(x)
    if act_func == "elu":
        return jax.nn.elu(x)
    raise ValueError(f"Unsupported act_func: {act_func!r}")


def _dropout_keep(r, c, seed, threshold31):
    """Deterministic keep-mask from global (row, col, seed).

    Pure int32 ops (wrapping mul, xor, logical shifts) so it lowers both on
    Mosaic TPU and in interpret mode.  keep probability ~= 1 - p where
    threshold31 = round(p * 2^31).
    """
    h = seed + r * jnp.int32(0x0019660D) + c * jnp.int32(0x3C6EF35F)
    h = h ^ lax.shift_right_logical(h, jnp.int32(16))
    h = h * jnp.int32(0x21F0AAAD)
    h = h ^ lax.shift_right_logical(h, jnp.int32(15))
    h = h * jnp.int32(0x735A2D97)
    h = h ^ lax.shift_right_logical(h, jnp.int32(16))
    return (h & jnp.int32(0x7FFFFFFF)) >= jnp.int32(threshold31)


def _keep_mask_block(shape, row0, col0, seed, threshold31):
    r = lax.broadcasted_iota(jnp.int32, shape, 0) + row0
    c = lax.broadcasted_iota(jnp.int32, shape, 1) + col0
    return _dropout_keep(r, c, seed, threshold31)


def _linear_block_kernel(seed_ref, *refs, act_func, threshold31, inv_keep,
                         has_bias, has_k_axis, tm, tk):
    if has_k_axis:
        if has_bias:
            x_ref, w_ref, b_ref, o_ref, acc_ref = refs
        else:
            x_ref, w_ref, o_ref, acc_ref = refs
            b_ref = None
    else:
        if has_bias:
            x_ref, w_ref, b_ref, o_ref = refs
        else:
            x_ref, w_ref, o_ref = refs
            b_ref = None
        acc_ref = None

    def finalize(acc_f32):
        if threshold31 is not None:
            # Dropout's 1/(1-p) scale commutes with the matmul; apply it once,
            # in f32, instead of per-(i,k) tile in the input dtype.
            acc_f32 = acc_f32 * jnp.float32(inv_keep)
        if has_bias:
            acc_f32 = acc_f32 + b_ref[...].astype(jnp.float32)
        acc_f32 = _apply_activation(acc_f32, act_func)
        return acc_f32.astype(o_ref.dtype)

    # Native-dtype tile straight to the MXU (no f32 upcast of operands).
    x = x_ref[...]

    if threshold31 is not None:
        # Mask depends only on (global row, global col, seed): identical across
        # output-column tiles and free of cross-tile seed collisions.
        row0 = pl.program_id(0) * tm
        col0 = pl.program_id(2) * tk if has_k_axis else 0
        keep = _keep_mask_block(x.shape, row0, col0, seed_ref[0], threshold31)
        x = jnp.where(keep, x, jnp.zeros_like(x))

    partial = jnp.dot(x, w_ref[...], preferred_element_type=jnp.float32)

    if has_k_axis:
        k = pl.program_id(2)

        @pl.when(k == 0)
        def _init():
            acc_ref[...] = jnp.zeros_like(acc_ref)

        acc_ref[...] += partial

        @pl.when(k == pl.num_programs(2) - 1)
        def _finalize():
            o_ref[...] = finalize(acc_ref[...])
    else:
        o_ref[...] = finalize(partial)


def prepare_linear_params(weight, bias=None, weight_dtype=None):
    """One-time parameter prep (call at init, NOT per forward):
      - transpose PyTorch (out, in) weight to (in, out) so the kernel is x @ W,
      - zero-pad both dims to multiples of 128 so every tile is lane-dense.
    """
    f_out, f_in = weight.shape
    k_pad = _round_up(f_in, _LANE)
    n_pad = _round_up(f_out, _LANE)
    w_t = jnp.asarray(weight).T
    if weight_dtype is not None:
        w_t = w_t.astype(weight_dtype)
    w_t = jnp.pad(w_t, ((0, k_pad - f_in), (0, n_pad - f_out)))
    b_p = None
    if bias is not None:
        b_p = jnp.pad(jnp.asarray(bias).reshape(1, f_out), ((0, 0), (0, n_pad - f_out)))
    return w_t, b_p


def linear_block(x, w_prepared, b_prepared=None, *, out_features,
                 act_func="", dropout_rate=0.0, seed=0, _max_tk=None):
    """Forward of LinearBlock:  act(dropout(x) @ W + b).

    x:           (B, in_features)
    w_prepared:  (k_pad, n_pad)  from prepare_linear_params (transposed + padded)
    b_prepared:  (1, n_pad) or None
    _max_tk:     testing knob to force the multi-K accumulate path on small K.
    """
    if act_func not in _SUPPORTED_ACTS:
        raise ValueError(f"Unsupported act_func: {act_func!r}")
    if dropout_rate < 0.0 or dropout_rate >= 1.0:
        if dropout_rate != 0.0:
            raise ValueError("dropout_rate must be in [0, 1)")

    B, f_in = x.shape
    k_pad, n_pad = w_prepared.shape
    assert k_pad >= f_in and k_pad % _LANE == 0 and n_pad % _LANE == 0
    assert out_features <= n_pad

    x_itemsize = jnp.dtype(x.dtype).itemsize
    w_itemsize = jnp.dtype(w_prepared.dtype).itemsize
    sub_min = _sublane_min(x.dtype)

    # ---- M tiling: minimal dtype-aligned padding; tiles that divide m_pad. ----
    if B <= 512:
        m_pad = _round_up(B, sub_min)
        tm = m_pad
    else:
        m_pad = _round_up(B, _LANE)
        tm = _pick_tile(m_pad, (512, 384, 256, 128))

    # ---- N tiling (n_pad is a multiple of 128, so this always succeeds). ----
    tn = _pick_tile(n_pad, (512, 384, 256, 128))

    # ---- K tiling: collapse the K grid axis when it fits in one block. ----
    max_single = _MAX_SINGLE_TK if _max_tk is None else min(_MAX_SINGLE_TK, _max_tk)
    if k_pad <= max_single:
        tk = k_pad
        k_steps = 1
    else:
        cands = tuple(c for c in (1024, 512, 384, 256, 128)
                      if _max_tk is None or c <= _max_tk)
        tk = _pick_tile(k_pad, cands if cands else (128,))
        k_steps = k_pad // tk

    # ---- Keep >= 2 parallel (i, j) tiles when tiles are big (v7x: 2 TCs). ----
    if (m_pad // tm) * (n_pad // tn) == 1:
        if tn >= 256 and (tn // 2) % _LANE == 0:
            tn //= 2
        elif tm >= 256 and (tm // 2) % sub_min == 0:
            tm //= 2

    # ---- VMEM working set (double-buffered tiles + f32 accumulator). ----
    out_itemsize = x_itemsize

    def _estimate(tk_, acc_):
        e = (2 * tm * tk_ * x_itemsize + 2 * tk_ * tn * w_itemsize
             + 2 * tm * tn * out_itemsize)
        if acc_:
            e += tm * tn * 4
        return e

    est = _estimate(tk, k_steps > 1)
    while est > _VMEM_SOFT_BUDGET and tk > _LANE and (tk // 2) % _LANE == 0:
        tk //= 2
        k_steps = k_pad // tk
        est = _estimate(tk, k_steps > 1)
    vmem_limit = int(min(48 * 2**20, max(3 * est, 16 * 2**20)))

    # ---- Pad x (rows to m_pad, cols to k_pad). ----
    x_p = x
    if (m_pad, k_pad) != (B, f_in):
        x_p = jnp.pad(x, ((0, m_pad - B), (0, k_pad - f_in)))

    # ---- Dropout parameters (mask threshold on 31 bits; scale kept in f32). ----
    threshold31 = None
    inv_keep = 1.0
    if dropout_rate > 0.0:
        p = float(dropout_rate)
        threshold31 = min(int(round(p * 2147483648.0)), 2**31 - 1)
        inv_keep = 1.0 / (1.0 - p)

    has_bias = b_prepared is not None
    has_k_axis = k_steps > 1

    kernel = functools.partial(
        _linear_block_kernel,
        act_func=act_func, threshold31=threshold31, inv_keep=inv_keep,
        has_bias=has_bias, has_k_axis=has_k_axis, tm=tm, tk=tk,
    )

    if has_k_axis:
        grid = (m_pad // tm, n_pad // tn, k_steps)
        in_specs = [
            pl.BlockSpec((tm, tk), lambda i, j, k, s: (i, k)),
            pl.BlockSpec((tk, tn), lambda i, j, k, s: (k, j)),
        ]
        operands = [x_p, w_prepared]
        if has_bias:
            in_specs.append(pl.BlockSpec((1, tn), lambda i, j, k, s: (0, j)))
            operands.append(b_prepared)
        out_spec = pl.BlockSpec((tm, tn), lambda i, j, k, s: (i, j))
        scratch = [pltpu.VMEM((tm, tn), jnp.float32)]
        dims = ("parallel", "parallel", "arbitrary")
    else:
        grid = (m_pad // tm, n_pad // tn)
        in_specs = [
            pl.BlockSpec((tm, tk), lambda i, j, s: (i, 0)),
            pl.BlockSpec((tk, tn), lambda i, j, s: (0, j)),
        ]
        operands = [x_p, w_prepared]
        if has_bias:
            in_specs.append(pl.BlockSpec((1, tn), lambda i, j, s: (0, j)))
            operands.append(b_prepared)
        out_spec = pl.BlockSpec((tm, tn), lambda i, j, s: (i, j))
        scratch = []
        dims = ("parallel", "parallel")

    # Seed is a runtime SMEM scalar: changing it never triggers a recompile.
    seed_arr = jnp.atleast_1d(jnp.asarray(seed, dtype=jnp.int32))

    out_padded = pl.pallas_call(
        kernel,
        out_shape=jax.ShapeDtypeStruct((m_pad, n_pad), x.dtype),
        grid_spec=pltpu.PrefetchScalarGridSpec(
            num_scalar_prefetch=1,
            grid=grid,
            in_specs=in_specs,
            out_specs=out_spec,
            scratch_shapes=scratch,
        ),
        compiler_params=pltpu.CompilerParams(
            dimension_semantics=dims,
            vmem_limit_bytes=vmem_limit,
        ),
    )(seed_arr, *operands)

    return out_padded[:B, :out_features]


if __name__ == "__main__":
    # Module config: LinearBlock(in_features=32, out_features=64, bias=True,
    #                            dropout_rate=0.0, act_func='relu')
    in_features, out_features = 32, 64
    batch = 8

    key = jax.random.PRNGKey(0)
    kx, kw, kb = jax.random.split(key, 3)
    bound = 1.0 / (in_features ** 0.5)
    weight = jax.random.uniform(kw, (out_features, in_features), jnp.float32, -bound, bound)
    bias = jax.random.uniform(kb, (out_features,), jnp.float32, -bound, bound)
    x = jax.random.normal(kx, (batch, in_features), jnp.float32)

    # One-time param prep (transpose + lane-dense padding).
    w_prep, b_prep = prepare_linear_params(weight, bias)

    # 1) Eval-mode forward (dropout is identity), f32 check.
    out = linear_block(x, w_prep, b_prep, out_features=out_features,
                       act_func="relu", dropout_rate=0.0, seed=0)
    out = jax.block_until_ready(out)
    ref = jnp.maximum(x @ weight.T + bias, 0.0)
    assert out.shape == (batch, out_features)
    assert jnp.allclose(out, ref, atol=2e-2, rtol=2e-2), "mismatch vs reference (eval)"

    # 2) Dropout path: the hash mask is deterministic from (row, col, seed), so
    #    the exact expected output can be reproduced host-side.
    p_drop, seed2 = 0.5, 1234
    out_drop = linear_block(x, w_prep, b_prep, out_features=out_features,
                            act_func="sigmoid", dropout_rate=p_drop, seed=seed2)
    out_drop = jax.block_until_ready(out_drop)
    thr31 = min(int(round(p_drop * 2147483648.0)), 2**31 - 1)
    rr = jnp.arange(batch, dtype=jnp.int32)[:, None]
    cc = jnp.arange(in_features, dtype=jnp.int32)[None, :]
    keep_host = _dropout_keep(rr, cc, jnp.int32(seed2), thr31)
    x_dropped = jnp.where(keep_host, x, 0.0) * jnp.float32(1.0 / (1.0 - p_drop))
    ref_drop = jax.nn.sigmoid(x_dropped @ weight.T + bias)
    assert out_drop.shape == (batch, out_features)
    assert jnp.allclose(out_drop, ref_drop, atol=2e-2, rtol=2e-2), "mismatch vs reference (dropout)"

    # 3) Larger bf16 check: multi-tile (i, j) parallel grid, single-K direct path.
    B2, f_in2, f_out2 = 384, 384, 512
    kx2, kw2, kb2 = jax.random.split(jax.random.PRNGKey(1), 3)
    bound2 = 1.0 / (f_in2 ** 0.5)
    w2 = jax.random.uniform(kw2, (f_out2, f_in2), jnp.float32, -bound2, bound2)
    b2 = jax.random.uniform(kb2, (f_out2,), jnp.float32, -bound2, bound2)
    x2 = jax.random.normal(kx2, (B2, f_in2), jnp.bfloat16)

    w2_prep, b2_prep = prepare_linear_params(w2, b2, weight_dtype=jnp.bfloat16)
    out2 = linear_block(x2, w2_prep, b2_prep, out_features=f_out2, act_func="gelu")
    out2 = jax.block_until_ready(out2)
    assert out2.shape == (B2, f_out2)
    ref2 = jax.nn.gelu(
        x2.astype(jnp.float32) @ w2_prep[:f_in2, :f_out2].astype(jnp.float32) + b2,
        approximate=True,
    )
    err2 = float(jnp.max(jnp.abs(out2.astype(jnp.float32) - ref2)))
    assert err2 < 5e-2, f"bf16 mismatch: max abs err {err2}"

    # 4) Force the multi-K accumulate path (f32 acc scratch + pl.when) with dropout,
    #    to exercise the K-grid kernel variant at small shapes.
    B3, f_in3, f_out3, p3, seed3 = 64, 256, 128, 0.25, 7
    kx3, kw3, kb3 = jax.random.split(jax.random.PRNGKey(2), 3)
    bound3 = 1.0 / (f_in3 ** 0.5)
    w3 = jax.random.uniform(kw3, (f_out3, f_in3), jnp.float32, -bound3, bound3)
    b3 = jax.random.uniform(kb3, (f_out3,), jnp.float32, -bound3, bound3)
    x3 = jax.random.normal(kx3, (B3, f_in3), jnp.float32)
    w3_prep, b3_prep = prepare_linear_params(w3, b3)
    out3 = linear_block(x3, w3_prep, b3_prep, out_features=f_out3,
                        act_func="", dropout_rate=p3, seed=seed3, _max_tk=128)
    out3 = jax.block_until_ready(out3)
    thr31_3 = min(int(round(p3 * 2147483648.0)), 2**31 - 1)
    rr3 = jnp.arange(B3, dtype=jnp.int32)[:, None]
    cc3 = jnp.arange(f_in3, dtype=jnp.int32)[None, :]
    keep3 = _dropout_keep(rr3, cc3, jnp.int32(seed3), thr31_3)
    ref3 = (jnp.where(keep3, x3, 0.0) * jnp.float32(1.0 / (1.0 - p3))) @ w3.T + b3
    assert out3.shape == (B3, f_out3)
    assert jnp.allclose(out3, ref3, atol=2e-2, rtol=2e-2), "mismatch vs reference (multi-K)"

    # 4b) No-bias branch, silu activation (single-K direct path).
    out3b = linear_block(x3, w3_prep, None, out_features=f_out3, act_func="silu")
    out3b = jax.block_until_ready(out3b)
    ref3b = jax.nn.silu(x3 @ w3.T)
    assert jnp.allclose(out3b, ref3b, atol=2e-2, rtol=2e-2), "mismatch vs reference (no bias)"

    print("KERNEL_OK")
</pallas_src>

<mosaic_0001>
module attributes {stable_mosaic.version = 11 : i64} {
  func.func @_linear_block_kernel(%arg0: i32, %arg1: i32, %arg2: memref<1xi32, #tpu.memory_space<smem>>, %arg3: memref<8x128xf32, #tpu.memory_space<vmem>>, %arg4: memref<128x128xf32, #tpu.memory_space<vmem>>, %arg5: memref<1x128xf32, #tpu.memory_space<vmem>>, %arg6: memref<8x128xf32, #tpu.memory_space<vmem>>) attributes {dimension_semantics = [#tpu.dimension_semantics<parallel>, #tpu.dimension_semantics<parallel>], iteration_bounds = array<i64: 1, 1>, scalar_prefetch = 1 : i64, scratch_operands = 0 : i64, tpu.core_type = #tpu.core_type<tc>, window_params = [{transform_indices = @transform_0, window_bounds = array<i64: 8, 128>}, {transform_indices = @transform_1, window_bounds = array<i64: 128, 128>}, {transform_indices = @transform_2, window_bounds = array<i64: 1, 128>}, {transform_indices = @transform_3, window_bounds = array<i64: 8, 128>}]} {
    %c0 = arith.constant 0 : index
    %c0_0 = arith.constant 0 : index
    %0 = vector.load %arg3[%c0, %c0_0] : memref<8x128xf32, #tpu.memory_space<vmem>>, vector<8x128xf32>
    %c0_1 = arith.constant 0 : index
    %c0_2 = arith.constant 0 : index
    %1 = vector.load %arg4[%c0_1, %c0_2] : memref<128x128xf32, #tpu.memory_space<vmem>>, vector<128x128xf32>
    %cst = arith.constant dense<0.000000e+00> : vector<8x128xf32>
    %2 = tpu.matmul %0, %1, %cst {dimension_numbers = #tpu.dot_dimension_numbers<[1], [0], [0], [1], [0, 0, 1, 1], [], []>} : vector<8x128xf32>, vector<128x128xf32>, vector<8x128xf32> -> vector<8x128xf32>
    %c0_3 = arith.constant 0 : index
    %c0_4 = arith.constant 0 : index
    %3 = vector.load %arg5[%c0_3, %c0_4] : memref<1x128xf32, #tpu.memory_space<vmem>>, vector<1x128xf32>
    %4 = vector.broadcast %3 : vector<1x128xf32> to vector<8x128xf32>
    %5 = arith.addf %2, %4 : vector<8x128xf32>
    %cst_5 = arith.constant 0.000000e+00 : f32
    %6 = vector.broadcast %cst_5 : f32 to vector<8x128xf32>
    %7 = arith.maximumf %5, %6 : vector<8x128xf32>
    %c0_6 = arith.constant 0 : index
    %c0_7 = arith.constant 0 : index
    %8 = vector.load %arg6[%c0_6, %c0_7] : memref<8x128xf32, #tpu.memory_space<vmem>>, vector<8x128xf32>
    tpu.vector_store %arg6[%c0_6, %c0_7], %7 {strides = array<i32>} : memref<8x128xf32, #tpu.memory_space<vmem>>, vector<8x128xf32>,
    return
  }
  func.func @transform_0(%arg0: i32, %arg1: i32, %arg2: memref<1xi32, #tpu.memory_space<smem>>) -> (i32, i32) {
    %c0_i32 = arith.constant 0 : i32
    %c0_i32_0 = arith.constant 0 : i32
    return %arg0, %c0_i32 : i32, i32
  }
  func.func @transform_1(%arg0: i32, %arg1: i32, %arg2: memref<1xi32, #tpu.memory_space<smem>>) -> (i32, i32) {
    %c0_i32 = arith.constant 0 : i32
    %c0_i32_0 = arith.constant 0 : i32
    return %c0_i32, %arg1 : i32, i32
  }
  func.func @transform_2(%arg0: i32, %arg1: i32, %arg2: memref<1xi32, #tpu.memory_space<smem>>) -> (i32, i32) {
    %c0_i32 = arith.constant 0 : i32
    %c0_i32_0 = arith.constant 0 : i32
    return %c0_i32, %arg1 : i32, i32
  }
  func.func @transform_3(%arg0: i32, %arg1: i32, %arg2: memref<1xi32, #tpu.memory_space<smem>>) -> (i32, i32) {
    %c0_i32 = arith.constant 0 : i32
    return %arg0, %arg1 : i32, i32
  }
}

</mosaic_0001>

<llo_original>
// kernel: tpu_custom_call.1
$region0: #{tpu_custom_call.1}
  #allocation0 [shape = 'u32[]', space=smem, size = 0x4, offset = 0x4, fixed_abs, tag = 'smem constant byte address 0x4 - core index']
  #allocation1 [shape = 'u32[144,128]{1,0:T(1,128)}', space=vmem, size = 0x12000, scoped, tag = 'internal scratch']
  #allocation2 [shape = 's32[1]{0}', space=sflag, size = 0x4, scoped, tag = 'scoped memory for tpu_custom_call.1']
  #allocation3 [shape = 's32[1]{0:T(128)S(6)}', space=smem, size = 0x200, scoped, tag = 'prefetched SMEM operand 0']
  %s0 = inlined_call_operand.<no memory space> [shape: s32[1], index: 0, kind: input, shape index: {}]
  %s1 = inlined_call_operand.hbm [shape: f32[8,128], index: 1, kind: input, shape index: {}]
  %s2 = inlined_call_operand.hbm [shape: f32[128,128], index: 2, kind: input, shape index: {}]
  %s3 = inlined_call_operand.vmem [shape: f32[1,128], index: 3, kind: input, shape index: {}]
  %s4 = inlined_call_operand.hbm [shape: f32[8,128], index: 4, kind: output, shape index: {}]
  %s5 = sld [smem:[#allocation0]]
  $region30: #{tpu_custom_call.1} parent=0
    _
  %s7 = ssub.s32 1, %s5
  %s8 = scalar_select 0, %s7, %s5
  %9 = sst [smem:[#allocation3]] %s0
  $region1: #{tpu_custom_call.1} parent=0
    #allocation4 [shape = 'u8[4096]{0}', space=vmem, size = 0x1000, scoped, tag = 'input window, operand 1, single buffered']
    #allocation5 [shape = 's32[1]{0}', space=sflag, size = 0x4, scoped, tag = 'scoped memory for tpu_custom_call.1']
    #allocation6 [shape = 's32[1]{0}', space=sflag, size = 0x4, scoped, tag = 'scoped memory for tpu_custom_call.1']
    #allocation7 [shape = 'u8[65536]{0}', space=vmem, size = 0x10000, scoped, tag = 'input window, operand 2, single buffered']
    #allocation8 [shape = 's32[1]{0}', space=sflag, size = 0x4, scoped, tag = 'scoped memory for tpu_custom_call.1']
    #allocation9 [shape = 'u8[4096]{0}', space=vmem, size = 0x1000, scoped, tag = 'output window, operand 0, single buffered']
    %10 = vsyncpa [#allocation5], 0
    %11 = vsyncpa [#allocation8], 0
    %12 = vsyncpa [#allocation6], 0
    // Predicated region
    $region2: #{tpu_custom_call.1} parent=1 // pred_check
      _
    $region3: #{tpu_custom_call.1} parent=1 // pred_check_branch
      %14 = sbr.rel (0) target = $region5
    $region4: #{tpu_custom_call.1} parent=1 // pred_region
      %s16 = ssub.s32 128, 128
      %17 = vsyncadd [#allocation5], %s16
      %s19 = sshll.u32 [#allocation4], 4
      %s20 = int_to_ptr.vmem [resolvable:$true] %s19
      %22 = dma.hbm_to_vmem [thread:$0]  %s1, 128, %s20, [#allocation5]
    $region5: #{tpu_custom_call.1} parent=1 // pred_fallthru
      _
    // Predicated region
    $region6: #{tpu_custom_call.1} parent=1 // pred_check
      _
    $region7: #{tpu_custom_call.1} parent=1 // pred_check_branch
      %24 = sbr.rel (0) target = $region9
    $region8: #{tpu_custom_call.1} parent=1 // pred_region
      %s26 = ssub.s32 2048, 2048
      %27 = vsyncadd [#allocation8], %s26
      %s28 = sshll.u32 [#allocation7], 4
      %s29 = int_to_ptr.vmem [resolvable:$true] %s28
      %34 = dma.hbm_to_vmem [thread:$0]  %s2, 2048, %s29, [#allocation8], 128, 128, 8
    $region9: #{tpu_custom_call.1} parent=1 // pred_fallthru
      _
    // Predicated region
    $region10: #{tpu_custom_call.1} parent=1 // pred_check
      _
    $region11: #{tpu_custom_call.1} parent=1 // pred_check_branch
      %36 = sbr.rel (0) target = $region13
    $region12: #{tpu_custom_call.1} parent=1 // pred_region
      _
    $region13: #{tpu_custom_call.1} parent=1 // pred_fallthru
      _
    // Predicated region
    $region14: #{tpu_custom_call.1} parent=1 // pred_check
      _
    $region15: #{tpu_custom_call.1} parent=1 // pred_check_branch
      %38 = sbr.rel (0) target = $region17
    $region16: #{tpu_custom_call.1} parent=1 // pred_region
      %39 = dma.done [#allocation5], 128
    $region17: #{tpu_custom_call.1} parent=1 // pred_fallthru
      _
    // Predicated region
    $region18: #{tpu_custom_call.1} parent=1 // pred_check
      _
    $region19: #{tpu_custom_call.1} parent=1 // pred_check_branch
      %41 = sbr.rel (0) target = $region21
    $region20: #{tpu_custom_call.1} parent=1 // pred_region
      %42 = dma.done [#allocation8], 2048
    $region21: #{tpu_custom_call.1} parent=1 // pred_fallthru
      _
    %v43 = vld [vmem:[#allocation4] sm:$0xff]
    %v44 = vld [vmem:[#allocation7] sm:$0xff]
    %v45 = vld [vmem:[#allocation7 + $0x8] sm:$0xff]
    %v46 = vld [vmem:[#allocation7 + $0x10] sm:$0xff]
    %v47 = vld [vmem:[#allocation7 + $0x18] sm:$0xff]
    %v48 = vld [vmem:[#allocation7 + $0x20] sm:$0xff]
    %v49 = vld [vmem:[#allocation7 + $0x28] sm:$0xff]
    %v50 = vld [vmem:[#allocation7 + $0x30] sm:$0xff]
    %v51 = vld [vmem:[#allocation7 + $0x38] sm:$0xff]
    %v52 = vld [vmem:[#allocation7 + $0x40] sm:$0xff]
    %v53 = vld [vmem:[#allocation7 + $0x48] sm:$0xff]
    %v54 = vld [vmem:[#allocation7 + $0x50] sm:$0xff]
    %v55 = vld [vmem:[#allocation7 + $0x58] sm:$0xff]
    %v56 = vld [vmem:[#allocation7 + $0x60] sm:$0xff]
    %v57 = vld [vmem:[#allocation7 + $0x68] sm:$0xff]
    %v58 = vld [vmem:[#allocation7 + $0x70] sm:$0xff]
    %v59 = vld [vmem:[#allocation7 + $0x78] sm:$0xff]
    %v60 = vld [vmem:[%s3] sm:$0x1]
    %v62 = vlaneseq
    %v63 = vshrl.u32 %v62, 7
    %v64 = vsub.s32 0, %v63
    %v65 = vrot.slane %v60, %v64
    %67 = vmatprep.subr.mxu0 0.0
    %68 = vmatpush1.msra.mxu0 %v44
    %69 = vmatprep.subr.mxu0 0.0
    %70 = vmatpush1.msra.mxu0 %v45
    %71 = vmatprep.subr.mxu0 0.0
    %72 = vmatpush1.msra.mxu0 %v46
    %73 = vmatprep.subr.mxu0 0.0
    %74 = vmatpush1.msra.mxu0 %v47
    %75 = vmatprep.subr.mxu0 0.0
    %76 = vmatpush1.msra.mxu0 %v48
    %77 = vmatprep.subr.mxu0 0.0
    %78 = vmatpush1.msra.mxu0 %v49
    %79 = vmatprep.subr.mxu0 0.0
    %80 = vmatpush1.msra.mxu0 %v50
    %81 = vmatprep.subr.mxu0 0.0
    %82 = vmatpush1.msra.mxu0 %v51
    %83 = vmatprep.subr.mxu0 0.0
    %84 = vmatpush1.msra.mxu0 %v52
    %85 = vmatprep.subr.mxu0 0.0
    %86 = vmatpush1.msra.mxu0 %v53
    %87 = vmatprep.subr.mxu0 0.0
    %88 = vmatpush1.msra.mxu0 %v54
    %89 = vmatprep.subr.mxu0 0.0
    %90 = vmatpush1.msra.mxu0 %v55
    %91 = vmatprep.subr.mxu0 0.0
    %92 = vmatpush1.msra.mxu0 %v56
    %93 = vmatprep.subr.mxu0 0.0
    %94 = vmatpush1.msra.mxu0 %v57
    %95 = vmatprep.subr.mxu0 0.0
    %96 = vmatpush1.msra.mxu0 %v58
    %97 = vmatprep.subr.mxu0 0.0
    %98 = vmatpush1.msra.mxu0 %v59
    %99 = vmatprep.subr.mxu0 0.0
    %100 = vmatpush1.msra.mxu0 0.0
    %101 = vmatprep.subr.mxu0 0.0
    %102 = vmatpush1.msra.mxu0 0.0
    %103 = vmatprep.subr.mxu0 0.0
    %104 = vmatpush1.msra.mxu0 0.0
    %105 = vmatprep.subr.mxu0 0.0
    %106 = vmatpush1.msra.mxu0 0.0
    %107 = vmatprep.subr.mxu0 0.0
    %108 = vmatpush1.msra.mxu0 0.0
    %109 = vmatprep.subr.mxu0 0.0
    %110 = vmatpush1.msra.mxu0 0.0
    %111 = vmatprep.subr.mxu0 0.0
    %112 = vmatpush1.msra.mxu0 0.0
    %113 = vmatprep.subr.mxu0 0.0
    %114 = vmatpush1.msra.mxu0 0.0
    %115 = vmatprep.subr.mxu0 0.0
    %116 = vmatpush1.msra.mxu0 0.0
    %117 = vmatprep.subr.mxu0 0.0
    %118 = vmatpush1.msra.mxu0 0.0
    %119 = vmatprep.subr.mxu0 0.0
    %120 = vmatpush1.msra.mxu0 0.0
    %121 = vmatprep.subr.mxu0 0.0
    %122 = vmatpush1.msra.mxu0 0.0
    %123 = vmatprep.subr.mxu0 0.0
    %124 = vmatpush1.msra.mxu0 0.0
    %125 = vmatprep.subr.mxu0 0.0
    %126 = vmatpush1.msra.mxu0 0.0
    %127 = vmatprep.subr.mxu0 0.0
    %128 = vmatpush1.msra.mxu0 0.0
    %129 = vmatprep.subr.mxu0 0.0
    %130 = vmatpush1.msra.mxu0 0.0
    %131 = vmatprep.mubr.f32.mxu0 0.0
    %132 = vmatmul.mubr.f32.gmra.mrb[0].mxu0 %v43
    %v133 = vpop.f32.mrb[0].mxu0
    %v134 = vadd.f32 %v65, %v133
    %v135 = vpop.f32.mrb[0].mxu0
    %136 = vdwg.mxu0
    %v137 = vmax.f32 %v134, 0.0
    %138 = vst [vmem:[#allocation9] sm:$0xff] %v137
    // Predicated region
    $region22: #{tpu_custom_call.1} parent=1 // pred_check
      _
    $region23: #{tpu_custom_call.1} parent=1 // pred_check_branch
      %140 = sbr.rel (0) target = $region25
    $region24: #{tpu_custom_call.1} parent=1 // pred_region
      %s142 = ssub.s32 128, 128
      %143 = vsyncadd [#allocation6], %s142
      %s145 = sshll.u32 [#allocation9], 4
      %s146 = int_to_ptr.vmem [resolvable:$true] %s145
      %148 = dma.vmem_to_hbm [thread:$0]  %s146, 128, %s4, [#allocation6]
    $region25: #{tpu_custom_call.1} parent=1 // pred_fallthru
      _
    // Predicated region
    $region26: #{tpu_custom_call.1} parent=1 // pred_check
      _
    $region27: #{tpu_custom_call.1} parent=1 // pred_check_branch
      %150 = sbr.rel (0) target = $region29
    $region28: #{tpu_custom_call.1} parent=1 // pred_region
      %151 = dma.done [#allocation6], 128
    $region29: #{tpu_custom_call.1} parent=1 // pred_fallthru
      _
    %152 = vsyncpa [#allocation5], 1
    %153 = vsyncpa [#allocation8], 1
    %154 = vsyncpa [#allocation6], 1

</llo_original>
